<compile_context>
chip_gen: v7x
topology: tpu7x:2x2x1
jax: 0.10.0
libtpu: 0.0.40
codegen_flags: <defaults>
</compile_context>

<pallas_src>
import jax
import jax.numpy as jnp
from jax.experimental import pallas as pl
from jax.experimental.pallas import tpu as pltpu


def _round_up(x, m):
    return (x + m - 1) // m * m


def _device_kind():
    try:
        return jax.devices()[0].device_kind.lower()
    except Exception:
        return ""


# ----------------------------------------------------------------------------
# Pallas kernel: fused 2-layer MLP (X @ W1 + b1 -> GELU -> @ W2 + b2)
# ----------------------------------------------------------------------------
def _make_mlp_kernel(act_dtype, approximate):
    def _mlp_kernel(x_ref, w1_ref, b1_ref, w2_ref, b2_ref, o_ref):
        x = x_ref[...]                                              # bf16 [tm, d_in]
        h = jnp.dot(x, w1_ref[...], preferred_element_type=jnp.float32)
        h = (h + b1_ref[...]).astype(act_dtype)                     # f32 acc, act in bf16 on v6e/v7x
        # approximate=True -> tanh GELU on the EUP slot; False -> exact erf
        # (torch.nn.GELU default semantics).
        h = jax.nn.gelu(h, approximate=approximate)
        y = jnp.dot(h.astype(w2_ref.dtype), w2_ref[...],
                    preferred_element_type=jnp.float32)
        y = y + b2_ref[...]
        o_ref[...] = y.astype(o_ref.dtype)                          # unpadded (tm, d_out) store
    return _mlp_kernel


def _pick_row_tile(rows, tile_rows, two_tc):
    # Single-TC chips (v5e/v6e): biggest row tile that fits -> fewest grid steps.
    # v7x (2 TCs): prefer >=2 grid steps so dimension_semantics=("parallel",)
    # can shard across cores, but never drop the M tile below 256.
    if two_tc and rows >= 512:
        return min(tile_rows, max(256, _round_up(pl.cdiv(rows, 2), 8)))
    tm = min(tile_rows, rows)
    if tm < rows:                     # multiple blocks -> tm must be a multiple of 8
        tm = _round_up(tm, 8)         # (no-op for the default tile_rows=512)
    return tm


def mlp_pallas(x2d, w1, b1, w2, b2, *, act_dtype=jnp.float32,
               approximate_gelu=True, tile_rows=512):
    """x2d: [rows, d_in] bf16; w1: [d_in, d_hid] bf16; w2: [d_hid, d_out] bf16;
       b1/b2: f32. Returns f32 [rows, d_out]."""
    rows, d_in = x2d.shape
    d_hid = w1.shape[1]
    d_out = w2.shape[1]

    two_tc = "v7" in _device_kind()
    tm = _pick_row_tile(rows, tile_rows, two_tc)
    grid = (pl.cdiv(rows, tm),)       # partial last block is masked; no jnp.pad pass

    b1r = b1.reshape(1, d_hid).astype(jnp.float32)
    b2r = b2.reshape(1, d_out).astype(jnp.float32)

    # Advisory cost hint for XLA scheduling around the custom call.
    cost = pl.CostEstimate(
        flops=2 * rows * (d_in * d_hid + d_hid * d_out),
        transcendentals=rows * d_hid,
        bytes_accessed=(rows * d_in * 2 + rows * d_out * 4
                        + (d_in * d_hid + d_hid * d_out) * 2
                        + (d_hid + d_out) * 4),
    )

    # Explicit scoped-VMEM budget: double-buffered x/out tiles + (double-buffered)
    # resident weights + the f32 hidden intermediate, plus slack.
    # TODO(synk): for large d_hid (resident W1+W2 >> VMEM) add a hidden-axis
    #             "arbitrary" grid dim that streams W1/W2 and accumulates in a
    #             VMEM scratch, and/or pipeline_mode=pl.Buffered(1) on weights.
    vmem_need = (2 * (tm * d_in * 2 + tm * d_out * 4)
                 + 2 * ((d_in * d_hid + d_hid * d_out) * 2 + (d_hid + d_out) * 4)
                 + 4 * tm * d_hid * 4
                 + (4 << 20))
    vmem_limit = int(min(100 << 20, max(vmem_need, 32 << 20)))

    # NOTE: d_in (=C*p*p) below 128 leaves the x tile lane-padded and the first
    # matmul's K feed half-occupied; matmul1 is not the bottleneck here so we
    # accept it.  Choose C*p*p as a multiple of 128 in the model config if possible.
    out = pl.pallas_call(
        _make_mlp_kernel(act_dtype, approximate_gelu),
        out_shape=jax.ShapeDtypeStruct((rows, d_out), jnp.float32),
        grid_spec=pltpu.PrefetchScalarGridSpec(
            num_scalar_prefetch=0,
            grid=grid,
            in_specs=[
                pl.BlockSpec((tm, d_in), lambda i: (i, 0)),       # activations, row-tiled
                pl.BlockSpec((d_in, d_hid), lambda i: (0, 0)),    # W1 resident
                pl.BlockSpec((1, d_hid), lambda i: (0, 0)),       # b1 resident
                pl.BlockSpec((d_hid, d_out), lambda i: (0, 0)),   # W2 resident
                pl.BlockSpec((1, d_out), lambda i: (0, 0)),       # b2 resident
            ],
            out_specs=pl.BlockSpec((tm, d_out), lambda i: (i, 0)),
        ),
        compiler_params=pltpu.CompilerParams(
            dimension_semantics=("parallel",),
            vmem_limit_bytes=vmem_limit,
        ),
        cost_estimate=cost,
    )(x2d, w1, b1r, w2, b2r)
    return out


# ----------------------------------------------------------------------------
# Early_feature wrapper (re_field=False)
# ----------------------------------------------------------------------------
class EarlyFeaturePallas:
    def __init__(self, in_channels, out_channels, patch_size=4, mlp_ratio=4,
                 approximate_gelu=True, act_dtype=None,
                 key=jax.random.PRNGKey(0)):
        self.patch_size = patch_size
        self.out_channels = out_channels
        # torch.nn.GELU default is exact erf (approximate_gelu=False); the tanh
        # form (True) is ~1e-3 off and ~2-3x cheaper on TPU (EUP slot).
        self.approximate_gelu = approximate_gelu
        kind = _device_kind()
        if act_dtype is None:
            # v6e/v7x have bf16 VALU/EUP -> bf16 activation math; v5e keeps f32.
            act_dtype = jnp.bfloat16 if ("v6" in kind or "v7" in kind) else jnp.float32
        self.act_dtype = act_dtype

        d_in = in_channels * patch_size * patch_size
        d_hid = int(d_in * mlp_ratio)

        k1, k2, k3, k4 = jax.random.split(key, 4)
        # deterministic synthetic init (roughly nn.Linear-like scale), f32 masters
        self.w1 = jax.random.normal(k1, (d_in, d_hid), jnp.float32) / jnp.sqrt(d_in)
        self.b1 = jax.random.normal(k2, (d_hid,), jnp.float32) * 0.01
        self.w2 = jax.random.normal(k3, (d_hid, out_channels), jnp.float32) / jnp.sqrt(d_hid)
        self.b2 = jax.random.normal(k4, (out_channels,), jnp.float32) * 0.01

        # one-time bf16 casts for the MXU (no lane padding of W2/b2 anymore)
        self.w1_bf = self.w1.astype(jnp.bfloat16)
        self.w2_bf = self.w2.astype(jnp.bfloat16)

    def __call__(self, x):
        # x: [B, T, C, H, W]  (NCHW per frame, matching PyTorch layout)
        B, T, C, H, W = x.shape
        p = self.patch_size
        hp, wp = H // p, W // p
        # Cast to bf16 BEFORE the patchify shuffle: the transpose is a full HBM
        # read+write of x, so doing it in bf16 halves its traffic.
        # TODO(synk): for very large B/H/W the patchify could be folded into a
        #             strided manual-DMA gather kernel instead of an XLA copy.
        xb = x.astype(jnp.bfloat16)
        patches = xb.reshape(B, T, C, hp, p, wp, p)
        patches = jnp.transpose(patches, (0, 3, 5, 1, 2, 4, 6))
        rows = B * hp * wp * T
        x2d = patches.reshape(rows, C * p * p)

        y2d = mlp_pallas(x2d, self.w1_bf, self.b1, self.w2_bf, self.b2,
                         act_dtype=self.act_dtype,
                         approximate_gelu=self.approximate_gelu)
        # Row order is (b, hp, wp, t)-major, so this reshape is a free view.
        return y2d.reshape(B * hp * wp, T, self.out_channels)


def _reference(x, mod):
    """Plain-JAX reference with the same numerics the kernel uses
    (bf16 inputs, f32 accumulate, configured GELU form / activation dtype)."""
    B, T, C, H, W = x.shape
    p = mod.patch_size
    hp, wp = H // p, W // p
    xb = x.astype(jnp.bfloat16)
    patches = jnp.transpose(xb.reshape(B, T, C, hp, p, wp, p), (0, 3, 5, 1, 2, 4, 6))
    x2d = patches.reshape(B * hp * wp * T, C * p * p)
    h = jnp.dot(x2d, mod.w1_bf, preferred_element_type=jnp.float32) + mod.b1
    h = jax.nn.gelu(h.astype(mod.act_dtype), approximate=mod.approximate_gelu)
    y = jnp.dot(h.astype(jnp.bfloat16), mod.w2_bf,
                preferred_element_type=jnp.float32) + mod.b2
    return y.reshape(B * hp * wp, T, mod.out_channels)


if __name__ == "__main__":
    key = jax.random.PRNGKey(0)
    kx, kp = jax.random.split(key)

    # small shapes consistent with the module
    B, T, C, H, W = 2, 4, 4, 16, 16
    patch_size = 4
    out_channels = 32
    mlp_ratio = 4

    x = jax.random.normal(kx, (B, T, C, H, W), jnp.float32)

    mod = EarlyFeaturePallas(in_channels=C, out_channels=out_channels,
                             patch_size=patch_size, mlp_ratio=mlp_ratio, key=kp)

    out = jax.block_until_ready(mod(x))

    ref = _reference(x, mod)
    assert out.shape == (B * (H // patch_size) * (W // patch_size), T, out_channels)
    err = jnp.max(jnp.abs(out - ref))
    assert jnp.allclose(out, ref, atol=2e-2, rtol=2e-2), f"max abs err = {err}"

    print("KERNEL_OK")
</pallas_src>

<mosaic_0001>
module attributes {stable_mosaic.version = 11 : i64} {
  func.func @_mlp_kernel(%arg0: i32, %arg1: memref<128x64xbf16, #tpu.memory_space<vmem>>, %arg2: memref<64x256xbf16, #tpu.memory_space<vmem>>, %arg3: memref<1x256xf32, #tpu.memory_space<vmem>>, %arg4: memref<256x32xbf16, #tpu.memory_space<vmem>>, %arg5: memref<1x32xf32, #tpu.memory_space<vmem>>, %arg6: memref<128x32xf32, #tpu.memory_space<vmem>>) attributes {dimension_semantics = [#tpu.dimension_semantics<parallel>], iteration_bounds = array<i64: 1>, scalar_prefetch = 0 : i64, scratch_operands = 0 : i64, tpu.core_type = #tpu.core_type<tc>, window_params = [{transform_indices = @transform_0, window_bounds = array<i64: 128, 64>}, {pipeline_mode = #tpu.pipeline_mode<synchronous>, transform_indices = @transform_1, window_bounds = array<i64: 64, 256>}, {pipeline_mode = #tpu.pipeline_mode<synchronous>, transform_indices = @transform_2, window_bounds = array<i64: 1, 256>}, {pipeline_mode = #tpu.pipeline_mode<synchronous>, transform_indices = @transform_3, window_bounds = array<i64: 256, 32>}, {pipeline_mode = #tpu.pipeline_mode<synchronous>, transform_indices = @transform_4, window_bounds = array<i64: 1, 32>}, {transform_indices = @transform_5, window_bounds = array<i64: 128, 32>}]} {
    %c0 = arith.constant 0 : index
    %c0_0 = arith.constant 0 : index
    %0 = vector.load %arg1[%c0, %c0_0] : memref<128x64xbf16, #tpu.memory_space<vmem>>, vector<128x64xbf16>
    %c0_1 = arith.constant 0 : index
    %c0_2 = arith.constant 0 : index
    %1 = vector.load %arg2[%c0_1, %c0_2] : memref<64x256xbf16, #tpu.memory_space<vmem>>, vector<64x256xbf16>
    %cst = arith.constant dense<0.000000e+00> : vector<128x256xf32>
    %2 = tpu.matmul %0, %1, %cst {dimension_numbers = #tpu.dot_dimension_numbers<[1], [0], [0], [1], [0, 0, 1, 1], [], []>} : vector<128x64xbf16>, vector<64x256xbf16>, vector<128x256xf32> -> vector<128x256xf32>
    %c0_3 = arith.constant 0 : index
    %c0_4 = arith.constant 0 : index
    %3 = vector.load %arg3[%c0_3, %c0_4] : memref<1x256xf32, #tpu.memory_space<vmem>>, vector<1x256xf32>
    %4 = vector.broadcast %3 : vector<1x256xf32> to vector<128x256xf32>
    %5 = arith.addf %2, %4 : vector<128x256xf32>
    %6 = arith.mulf %5, %5 : vector<128x256xf32>
    %7 = arith.mulf %5, %6 : vector<128x256xf32>
    %cst_5 = arith.constant 4.471500e-02 : f32
    %8 = vector.broadcast %cst_5 : f32 to vector<128x256xf32>
    %9 = arith.mulf %8, %7 : vector<128x256xf32>
    %10 = arith.addf %5, %9 : vector<128x256xf32>
    %cst_6 = arith.constant 0.797884583 : f32
    %11 = vector.broadcast %cst_6 : f32 to vector<128x256xf32>
    %12 = arith.mulf %11, %10 : vector<128x256xf32>
    %13 = math.tanh %12 : vector<128x256xf32>
    %cst_7 = arith.constant 1.000000e+00 : f32
    %14 = vector.broadcast %cst_7 : f32 to vector<128x256xf32>
    %15 = arith.addf %14, %13 : vector<128x256xf32>
    %cst_8 = arith.constant 5.000000e-01 : f32
    %16 = vector.broadcast %cst_8 : f32 to vector<128x256xf32>
    %17 = arith.mulf %16, %15 : vector<128x256xf32>
    %18 = arith.mulf %5, %17 : vector<128x256xf32>
    %19 = arith.truncf %18 : vector<128x256xf32> to vector<128x256xbf16>
    %c0_9 = arith.constant 0 : index
    %c0_10 = arith.constant 0 : index
    %20 = vector.load %arg4[%c0_9, %c0_10] : memref<256x32xbf16, #tpu.memory_space<vmem>>, vector<256x32xbf16>
    %cst_11 = arith.constant dense<0.000000e+00> : vector<128x32xf32>
    %21 = tpu.matmul %19, %20, %cst_11 {dimension_numbers = #tpu.dot_dimension_numbers<[1], [0], [0], [1], [0, 0, 1, 1], [], []>} : vector<128x256xbf16>, vector<256x32xbf16>, vector<128x32xf32> -> vector<128x32xf32>
    %c0_12 = arith.constant 0 : index
    %c0_13 = arith.constant 0 : index
    %22 = vector.load %arg5[%c0_12, %c0_13] : memref<1x32xf32, #tpu.memory_space<vmem>>, vector<1x32xf32>
    %23 = vector.broadcast %22 : vector<1x32xf32> to vector<128x32xf32>
    %24 = arith.addf %21, %23 : vector<128x32xf32>
    %c0_14 = arith.constant 0 : index
    %c0_15 = arith.constant 0 : index
    %25 = vector.load %arg6[%c0_14, %c0_15] : memref<128x32xf32, #tpu.memory_space<vmem>>, vector<128x32xf32>
    tpu.vector_store %arg6[%c0_14, %c0_15], %24 {strides = array<i32>} : memref<128x32xf32, #tpu.memory_space<vmem>>, vector<128x32xf32>,
    return
  }
  func.func @transform_0(%arg0: i32) -> (i32, i32) {
    %c0_i32 = arith.constant 0 : i32
    %c0_i32_0 = arith.constant 0 : i32
    return %arg0, %c0_i32 : i32, i32
  }
  func.func @transform_1(%arg0: i32) -> (i32, i32) {
    %c0_i32 = arith.constant 0 : i32
    %c0_i32_0 = arith.constant 0 : i32
    %c0_i32_1 = arith.constant 0 : i32
    return %c0_i32, %c0_i32_0 : i32, i32
  }
  func.func @transform_2(%arg0: i32) -> (i32, i32) {
    %c0_i32 = arith.constant 0 : i32
    %c0_i32_0 = arith.constant 0 : i32
    %c0_i32_1 = arith.constant 0 : i32
    return %c0_i32, %c0_i32_0 : i32, i32
  }
  func.func @transform_3(%arg0: i32) -> (i32, i32) {
    %c0_i32 = arith.constant 0 : i32
    %c0_i32_0 = arith.constant 0 : i32
    %c0_i32_1 = arith.constant 0 : i32
    return %c0_i32, %c0_i32_0 : i32, i32
  }
  func.func @transform_4(%arg0: i32) -> (i32, i32) {
    %c0_i32 = arith.constant 0 : i32
    %c0_i32_0 = arith.constant 0 : i32
    %c0_i32_1 = arith.constant 0 : i32
    return %c0_i32, %c0_i32_0 : i32, i32
  }
  func.func @transform_5(%arg0: i32) -> (i32, i32) {
    %c0_i32 = arith.constant 0 : i32
    %c0_i32_0 = arith.constant 0 : i32
    return %arg0, %c0_i32 : i32, i32
  }
}

</mosaic_0001>

<llo_original>
// kernel: tpu_custom_call.1
$region0: #{tpu_custom_call.1}
  #allocation0 [shape = 'u32[]', space=smem, size = 0x4, offset = 0x4, fixed_abs, tag = 'smem constant byte address 0x4 - core index']
  #allocation1 [shape = 'u32[144,128]{1,0:T(1,128)}', space=vmem, size = 0x12000, scoped, tag = 'internal scratch']
  %s0 = inlined_call_operand.vmem [shape: bf16[128,64], index: 0, kind: input, shape index: {}]
  %s1 = inlined_call_operand.vmem [shape: bf16[64,256], index: 1, kind: input, shape index: {}]
  %s2 = inlined_call_operand.vmem [shape: f32[1,256], index: 2, kind: input, shape index: {}]
  %s3 = inlined_call_operand.vmem [shape: bf16[256,32], index: 3, kind: input, shape index: {}]
  %s4 = inlined_call_operand.vmem [shape: f32[1,32], index: 4, kind: input, shape index: {}]
  %s5 = inlined_call_operand.vmem [shape: f32[128,32], index: 5, kind: output, shape index: {}]
  %s6 = sld [smem:[#allocation0]]
  $region30: #{tpu_custom_call.1} parent=0
    _
  %s8 = ssub.s32 1, %s6
  %s9 = scalar_select 0, %s8, %s6
  // Predicated region
  $region2: #{tpu_custom_call.1} parent=0 // pred_check
    _
  $region3: #{tpu_custom_call.1} parent=0 // pred_check_branch
    %11 = sbr.rel (0) target = $region5
  $region4: #{tpu_custom_call.1} parent=0 // pred_region
    _
  $region5: #{tpu_custom_call.1} parent=0 // pred_fallthru
    _
  // Predicated region
  $region6: #{tpu_custom_call.1} parent=0 // pred_check
    _
  $region7: #{tpu_custom_call.1} parent=0 // pred_check_branch
    %13 = sbr.rel (0) target = $region9
  $region8: #{tpu_custom_call.1} parent=0 // pred_region
    _
  $region9: #{tpu_custom_call.1} parent=0 // pred_fallthru
    _
  // Predicated region
  $region10: #{tpu_custom_call.1} parent=0 // pred_check
    _
  $region11: #{tpu_custom_call.1} parent=0 // pred_check_branch
    %15 = sbr.rel (0) target = $region13
  $region12: #{tpu_custom_call.1} parent=0 // pred_region
    _
  $region13: #{tpu_custom_call.1} parent=0 // pred_fallthru
    _
  // Predicated region
  $region14: #{tpu_custom_call.1} parent=0 // pred_check
    _
  $region15: #{tpu_custom_call.1} parent=0 // pred_check_branch
    %17 = sbr.rel (0) target = $region17
  $region16: #{tpu_custom_call.1} parent=0 // pred_region
    _
  $region17: #{tpu_custom_call.1} parent=0 // pred_fallthru
    _
  // Predicated region
  $region18: #{tpu_custom_call.1} parent=0 // pred_check
    _
  $region19: #{tpu_custom_call.1} parent=0 // pred_check_branch
    %19 = sbr.rel (0) target = $region21
  $region20: #{tpu_custom_call.1} parent=0 // pred_region
    _
  $region21: #{tpu_custom_call.1} parent=0 // pred_fallthru
    _
  %v21 = vld [vmem:[%s0] sm:$0xf]
  %v22 = vld [vmem:[%s0 + $0x4] sm:$0xf]
  %v23 = vld [vmem:[%s0 + $0x8] sm:$0xf]
  %v24 = vld [vmem:[%s0 + $0xc] sm:$0xf]
  %v25 = vld [vmem:[%s0 + $0x10] sm:$0xf]
  %v26 = vld [vmem:[%s0 + $0x14] sm:$0xf]
  %v27 = vld [vmem:[%s0 + $0x18] sm:$0xf]
  %v28 = vld [vmem:[%s0 + $0x1c] sm:$0xf]
  %v29 = vld [vmem:[%s0 + $0x20] sm:$0xf]
  %v30 = vld [vmem:[%s0 + $0x24] sm:$0xf]
  %v31 = vld [vmem:[%s0 + $0x28] sm:$0xf]
  %v32 = vld [vmem:[%s0 + $0x2c] sm:$0xf]
  %v33 = vld [vmem:[%s0 + $0x30] sm:$0xf]
  %v34 = vld [vmem:[%s0 + $0x34] sm:$0xf]
  %v35 = vld [vmem:[%s0 + $0x38] sm:$0xf]
  %v36 = vld [vmem:[%s0 + $0x3c] sm:$0xf]
  %v37 = vld [vmem:[%s1] sm:$0xff]
  %v38 = vld [vmem:[%s1 + $0x8] sm:$0xff]
  %v39 = vld [vmem:[%s1 + $0x10] sm:$0xff]
  %v40 = vld [vmem:[%s1 + $0x18] sm:$0xff]
  %v41 = vld [vmem:[%s1 + $0x20] sm:$0xff]
  %v42 = vld [vmem:[%s1 + $0x28] sm:$0xff]
  %v43 = vld [vmem:[%s1 + $0x30] sm:$0xff]
  %v44 = vld [vmem:[%s1 + $0x38] sm:$0xff]
  %v45 = vld [vmem:[%s2] sm:$0x3]
  %v47 = vlaneseq
  %v48 = vshrl.u32 %v47, 7
  %v49 = vsub.s32 0, %v48
  %v50 = vrot.slane %v45, %v49
  %v51 = vlaneseq
  %v52 = vshrl.u32 %v51, 7
  %v53 = vsub.s32 1, %v52
  %v54 = vrot.slane %v45, %v53
  %v73 = vunpack.c.l.b16 %v21
  %v74 = vunpack.c.l.b16 %v22
  %v75 = vunpack.c.l.b16 %v23
  %v76 = vunpack.c.l.b16 %v24
  %v77 = vunpack.c.l.b16 %v25
  %v78 = vunpack.c.l.b16 %v26
  %v79 = vunpack.c.l.b16 %v27
  %v80 = vunpack.c.l.b16 %v28
  %v81 = vunpack.c.l.b16 %v29
  %v82 = vunpack.c.l.b16 %v30
  %v83 = vunpack.c.l.b16 %v31
  %v84 = vunpack.c.l.b16 %v32
  %v85 = vunpack.c.l.b16 %v33
  %v86 = vunpack.c.l.b16 %v34
  %v87 = vunpack.c.l.b16 %v35
  %v88 = vunpack.c.l.b16 %v36
  %v89 = vpack.c.b16 %v74, %v73
  %v90 = vpack.c.b16 %v76, %v75
  %v91 = vpack.c.b16 %v78, %v77
  %v92 = vpack.c.b16 %v80, %v79
  %v93 = vpack.c.b16 %v82, %v81
  %v94 = vpack.c.b16 %v84, %v83
  %v95 = vpack.c.b16 %v86, %v85
  %v96 = vpack.c.b16 %v88, %v87
  %v105 = vunpack.c.l.b16 %v37
  %v106 = vunpack.c.h.b16 %v37
  %v107 = vunpack.c.l.b16 %v38
  %v108 = vunpack.c.h.b16 %v38
  %v109 = vunpack.c.l.b16 %v39
  %v110 = vunpack.c.h.b16 %v39
  %v111 = vunpack.c.l.b16 %v40
  %v112 = vunpack.c.h.b16 %v40
  %v113 = vunpack.c.l.b16 %v41
  %v114 = vunpack.c.h.b16 %v41
  %v115 = vunpack.c.l.b16 %v42
  %v116 = vunpack.c.h.b16 %v42
  %v117 = vunpack.c.l.b16 %v43
  %v118 = vunpack.c.h.b16 %v43
  %v119 = vunpack.c.l.b16 %v44
  %v120 = vunpack.c.h.b16 %v44
  %v121 = vpack.c.b16 %v107, %v105
  %v122 = vpack.c.b16 %v108, %v106
  %v123 = vpack.c.b16 %v111, %v109
  %v124 = vpack.c.b16 %v112, %v110
  %v125 = vpack.c.b16 %v115, %v113
  %v126 = vpack.c.b16 %v116, %v114
  %v127 = vpack.c.b16 %v119, %v117
  %v128 = vpack.c.b16 %v120, %v118
  %vm137 = vcmask 523264
  %v139 = vsel %vm137, %v89, 0
  %v142 = vsel %vm137, %v90, 0
  %v145 = vsel %vm137, %v91, 0
  %v148 = vsel %vm137, %v92, 0
  %v151 = vsel %vm137, %v93, 0
  %v154 = vsel %vm137, %v94, 0
  %v157 = vsel %vm137, %v95, 0
  %v160 = vsel %vm137, %v96, 0
  %162 = vmatprep.subr.bf16.mxu0 %v122
  %163 = vmatpush1.bf16.msra.mxu0 %v121
  %164 = vmatprep.subr.bf16.mxu0 %v124
  %165 = vmatpush1.bf16.msra.mxu0 %v123
  %166 = vmatprep.subr.bf16.mxu0 %v126
  %167 = vmatpush1.bf16.msra.mxu0 %v125
  %168 = vmatprep.subr.bf16.mxu0 %v128
  %169 = vmatpush1.bf16.msra.mxu0 %v127
  %170 = vmatprep.subr.bf16.mxu0 0
  %171 = vmatpush1.bf16.msra.mxu0 0
  %172 = vmatprep.subr.bf16.mxu0 0
  %173 = vmatpush1.bf16.msra.mxu0 0
  %174 = vmatprep.subr.bf16.mxu0 0
  %175 = vmatpush1.bf16.msra.mxu0 0
  %176 = vmatprep.subr.bf16.mxu0 0
  %177 = vmatpush1.bf16.msra.mxu0 0
  %178 = vmatprep.subr.bf16.mxu0 0
  %179 = vmatpush1.bf16.msra.mxu0 0
  %180 = vmatprep.subr.bf16.mxu0 0
  %181 = vmatpush1.bf16.msra.mxu0 0
  %182 = vmatprep.subr.bf16.mxu0 0
  %183 = vmatpush1.bf16.msra.mxu0 0
  %184 = vmatprep.subr.bf16.mxu0 0
  %185 = vmatpush1.bf16.msra.mxu0 0
  %186 = vmatprep.subr.bf16.mxu0 0
  %187 = vmatpush1.bf16.msra.mxu0 0
  %188 = vmatprep.subr.bf16.mxu0 0
  %189 = vmatpush1.bf16.msra.mxu0 0
  %190 = vmatprep.subr.bf16.mxu0 0
  %191 = vmatpush1.bf16.msra.mxu0 0
  %192 = vmatprep.subr.bf16.mxu0 0
  %193 = vmatpush1.bf16.msra.mxu0 0
  %194 = vmatprep.mubr.bf16.mxu0 0
  %195 = vmatmul.mubr.bf16.gmra.mrb[0].mxu0 %v139
  %v196 = vpop.f32.mrb[0].mxu0
  %v197 = vadd.f32 %v50, %v196
  %v198 = vpop.f32.mrb[0].mxu0
  %v199 = vadd.f32 %v54, %v198
  %v200 = vpop.f32.mrb[0].mxu0
  %v201 = vadd.f32 %v50, %v200
  %v202 = vpop.f32.mrb[0].mxu0
  %v203 = vadd.f32 %v54, %v202
  %204 = vmatprep.mubr.bf16.mxu0 0
  %205 = vmatmul.mubr.bf16.gmra.mrb[0].mxu0 %v142
  %v206 = vpop.f32.mrb[0].mxu0
  %v207 = vadd.f32 %v50, %v206
  %v208 = vpop.f32.mrb[0].mxu0
  %v209 = vadd.f32 %v54, %v208
  %v210 = vpop.f32.mrb[0].mxu0
  %v211 = vadd.f32 %v50, %v210
  %v212 = vpop.f32.mrb[0].mxu0
  %v213 = vadd.f32 %v54, %v212
  %214 = vmatprep.mubr.bf16.mxu0 0
  %215 = vmatmul.mubr.bf16.gmra.mrb[0].mxu0 %v145
  %v216 = vpop.f32.mrb[0].mxu0
  %v217 = vadd.f32 %v50, %v216
  %v218 = vpop.f32.mrb[0].mxu0
  %v219 = vadd.f32 %v54, %v218
  %v220 = vpop.f32.mrb[0].mxu0
  %v221 = vadd.f32 %v50, %v220
  %v222 = vpop.f32.mrb[0].mxu0
  %v223 = vadd.f32 %v54, %v222
  %224 = vmatprep.mubr.bf16.mxu0 0
  %225 = vmatmul.mubr.bf16.gmra.mrb[0].mxu0 %v148
  %v226 = vpop.f32.mrb[0].mxu0
  %v227 = vadd.f32 %v50, %v226
  %v228 = vpop.f32.mrb[0].mxu0
  %v229 = vadd.f32 %v54, %v228
  %v230 = vpop.f32.mrb[0].mxu0
  %v231 = vadd.f32 %v50, %v230
  %v232 = vpop.f32.mrb[0].mxu0
  %v233 = vadd.f32 %v54, %v232
  %234 = vmatprep.mubr.bf16.mxu0 0
  %235 = vmatmul.mubr.bf16.gmra.mrb[0].mxu0 %v151
  %v236 = vpop.f32.mrb[0].mxu0
  %v237 = vadd.f32 %v50, %v236
  %v238 = vpop.f32.mrb[0].mxu0
  %v239 = vadd.f32 %v54, %v238
  %v240 = vpop.f32.mrb[0].mxu0
  %v241 = vadd.f32 %v50, %v240
  %v242 = vpop.f32.mrb[0].mxu0
  %v243 = vadd.f32 %v54, %v242
  %244 = vmatprep.mubr.bf16.mxu0 0
  %245 = vmatmul.mubr.bf16.gmra.mrb[0].mxu0 %v154
  %v246 = vpop.f32.mrb[0].mxu0
  %v247 = vadd.f32 %v50, %v246
  %v248 = vpop.f32.mrb[0].mxu0
  %v249 = vadd.f32 %v54, %v248
  %v250 = vpop.f32.mrb[0].mxu0
  %v251 = vadd.f32 %v50, %v250
  %v252 = vpop.f32.mrb[0].mxu0
  %v253 = vadd.f32 %v54, %v252
  %254 = vmatprep.mubr.bf16.mxu0 0
  %255 = vmatmul.mubr.bf16.gmra.mrb[0].mxu0 %v157
  %v256 = vpop.f32.mrb[0].mxu0
  %v257 = vadd.f32 %v50, %v256
  %v258 = vpop.f32.mrb[0].mxu0
  %v259 = vadd.f32 %v54, %v258
  %v260 = vpop.f32.mrb[0].mxu0
  %v261 = vadd.f32 %v50, %v260
  %v262 = vpop.f32.mrb[0].mxu0
  %v263 = vadd.f32 %v54, %v262
  %264 = vmatprep.mubr.bf16.mxu0 0
  %265 = vmatmul.mubr.bf16.gmra.mrb[0].mxu0 %v160
  %v266 = vpop.f32.mrb[0].mxu0
  %v267 = vadd.f32 %v50, %v266
  %v268 = vpop.f32.mrb[0].mxu0
  %v269 = vadd.f32 %v54, %v268
  %v270 = vpop.f32.mrb[0].mxu0
  %v271 = vadd.f32 %v50, %v270
  %v272 = vpop.f32.mrb[0].mxu0
  %v273 = vadd.f32 %v54, %v272
  %274 = vdwg.mxu0
  %v275 = vmul.f32 %v197, %v197
  %v276 = vmul.f32 %v199, %v199
  %v277 = vmul.f32 %v201, %v201
  %v278 = vmul.f32 %v203, %v203
  %v279 = vmul.f32 %v207, %v207
  %v280 = vmul.f32 %v209, %v209
  %v281 = vmul.f32 %v211, %v211
  %v282 = vmul.f32 %v213, %v213
  %v283 = vmul.f32 %v217, %v217
  %v284 = vmul.f32 %v219, %v219
  %v285 = vmul.f32 %v221, %v221
  %v286 = vmul.f32 %v223, %v223
  %v287 = vmul.f32 %v227, %v227
  %v288 = vmul.f32 %v229, %v229
  %v289 = vmul.f32 %v231, %v231
  %v290 = vmul.f32 %v233, %v233
  %v291 = vmul.f32 %v237, %v237
  %v292 = vmul.f32 %v239, %v239
  %v293 = vmul.f32 %v241, %v241
  %v294 = vmul.f32 %v243, %v243
  %v295 = vmul.f32 %v247, %v247
  %v296 = vmul.f32 %v249, %v249
  %v297 = vmul.f32 %v251, %v251
  %v298 = vmul.f32 %v253, %v253
  %v299 = vmul.f32 %v257, %v257
  %v300 = vmul.f32 %v259, %v259
  %v301 = vmul.f32 %v261, %v261
  %v302 = vmul.f32 %v263, %v263
  %v303 = vmul.f32 %v267, %v267
  %v304 = vmul.f32 %v269, %v269
  %v305 = vmul.f32 %v271, %v271
  %v306 = vmul.f32 %v273, %v273
  %v307 = vmul.f32 %v197, %v275
  %v308 = vmul.f32 %v199, %v276
  %v309 = vmul.f32 %v201, %v277
  %v310 = vmul.f32 %v203, %v278
  %v311 = vmul.f32 %v207, %v279
  %v312 = vmul.f32 %v209, %v280
  %v313 = vmul.f32 %v211, %v281
  %v314 = vmul.f32 %v213, %v282
  %v315 = vmul.f32 %v217, %v283
  %v316 = vmul.f32 %v219, %v284
  %v317 = vmul.f32 %v221, %v285
  %v318 = vmul.f32 %v223, %v286
  %v319 = vmul.f32 %v227, %v287
  %v320 = vmul.f32 %v229, %v288
  %v321 = vmul.f32 %v231, %v289
  %v322 = vmul.f32 %v233, %v290
  %v323 = vmul.f32 %v237, %v291
  %v324 = vmul.f32 %v239, %v292
  %v325 = vmul.f32 %v241, %v293
  %v326 = vmul.f32 %v243, %v294
  %v327 = vmul.f32 %v247, %v295
  %v328 = vmul.f32 %v249, %v296
  %v329 = vmul.f32 %v251, %v297
  %v330 = vmul.f32 %v253, %v298
  %v331 = vmul.f32 %v257, %v299
  %v332 = vmul.f32 %v259, %v300
  %v333 = vmul.f32 %v261, %v301
  %v334 = vmul.f32 %v263, %v302
  %v335 = vmul.f32 %v267, %v303
  %v336 = vmul.f32 %v269, %v304
  %v337 = vmul.f32 %v271, %v305
  %v338 = vmul.f32 %v273, %v306
  %v339 = vmul.f32 %v307, 0.044715
  %v340 = vmul.f32 %v308, 0.044715
  %v341 = vmul.f32 %v309, 0.044715
  %v342 = vmul.f32 %v310, 0.044715
  %v343 = vmul.f32 %v311, 0.044715
  %v344 = vmul.f32 %v312, 0.044715
  %v345 = vmul.f32 %v313, 0.044715
  %v346 = vmul.f32 %v314, 0.044715
  %v347 = vmul.f32 %v315, 0.044715
  %v348 = vmul.f32 %v316, 0.044715
  %v349 = vmul.f32 %v317, 0.044715
  %v350 = vmul.f32 %v318, 0.044715
  %v351 = vmul.f32 %v319, 0.044715
  %v352 = vmul.f32 %v320, 0.044715
  %v353 = vmul.f32 %v321, 0.044715
  %v354 = vmul.f32 %v322, 0.044715
  %v355 = vmul.f32 %v323, 0.044715
  %v356 = vmul.f32 %v324, 0.044715
  %v357 = vmul.f32 %v325, 0.044715
  %v358 = vmul.f32 %v326, 0.044715
  %v359 = vmul.f32 %v327, 0.044715
  %v360 = vmul.f32 %v328, 0.044715
  %v361 = vmul.f32 %v329, 0.044715
  %v362 = vmul.f32 %v330, 0.044715
  %v363 = vmul.f32 %v331, 0.044715
  %v364 = vmul.f32 %v332, 0.044715
  %v365 = vmul.f32 %v333, 0.044715
  %v366 = vmul.f32 %v334, 0.044715
  %v367 = vmul.f32 %v335, 0.044715
  %v368 = vmul.f32 %v336, 0.044715
  %v369 = vmul.f32 %v337, 0.044715
  %v370 = vmul.f32 %v338, 0.044715
  %v371 = vadd.f32 %v197, %v339
  %v372 = vadd.f32 %v199, %v340
  %v373 = vadd.f32 %v201, %v341
  %v374 = vadd.f32 %v203, %v342
  %v375 = vadd.f32 %v207, %v343
  %v376 = vadd.f32 %v209, %v344
  %v377 = vadd.f32 %v211, %v345
  %v378 = vadd.f32 %v213, %v346
  %v379 = vadd.f32 %v217, %v347
  %v380 = vadd.f32 %v219, %v348
  %v381 = vadd.f32 %v221, %v349
  %v382 = vadd.f32 %v223, %v350
  %v383 = vadd.f32 %v227, %v351
  %v384 = vadd.f32 %v229, %v352
  %v385 = vadd.f32 %v231, %v353
  %v386 = vadd.f32 %v233, %v354
  %v387 = vadd.f32 %v237, %v355
  %v388 = vadd.f32 %v239, %v356
  %v389 = vadd.f32 %v241, %v357
  %v390 = vadd.f32 %v243, %v358
  %v391 = vadd.f32 %v247, %v359
  %v392 = vadd.f32 %v249, %v360
  %v393 = vadd.f32 %v251, %v361
  %v394 = vadd.f32 %v253, %v362
  %v395 = vadd.f32 %v257, %v363
  %v396 = vadd.f32 %v259, %v364
  %v397 = vadd.f32 %v261, %v365
  %v398 = vadd.f32 %v263, %v366
  %v399 = vadd.f32 %v267, %v367
  %v400 = vadd.f32 %v269, %v368
  %v401 = vadd.f32 %v271, %v369
  %v402 = vadd.f32 %v273, %v370
  %v403 = vmul.f32 %v371, 0.7978846
  %v404 = vmul.f32 %v372, 0.7978846
  %v405 = vmul.f32 %v373, 0.7978846
  %v406 = vmul.f32 %v374, 0.7978846
  %v407 = vmul.f32 %v375, 0.7978846
  %v408 = vmul.f32 %v376, 0.7978846
  %v409 = vmul.f32 %v377, 0.7978846
  %v410 = vmul.f32 %v378, 0.7978846
  %v411 = vmul.f32 %v379, 0.7978846
  %v412 = vmul.f32 %v380, 0.7978846
  %v413 = vmul.f32 %v381, 0.7978846
  %v414 = vmul.f32 %v382, 0.7978846
  %v415 = vmul.f32 %v383, 0.7978846
  %v416 = vmul.f32 %v384, 0.7978846
  %v417 = vmul.f32 %v385, 0.7978846
  %v418 = vmul.f32 %v386, 0.7978846
  %v419 = vmul.f32 %v387, 0.7978846
  %v420 = vmul.f32 %v388, 0.7978846
  %v421 = vmul.f32 %v389, 0.7978846
  %v422 = vmul.f32 %v390, 0.7978846
  %v423 = vmul.f32 %v391, 0.7978846
  %v424 = vmul.f32 %v392, 0.7978846
  %v425 = vmul.f32 %v393, 0.7978846
  %v426 = vmul.f32 %v394, 0.7978846
  %v427 = vmul.f32 %v395, 0.7978846
  %v428 = vmul.f32 %v396, 0.7978846
  %v429 = vmul.f32 %v397, 0.7978846
  %v430 = vmul.f32 %v398, 0.7978846
  %v431 = vmul.f32 %v399, 0.7978846
  %v432 = vmul.f32 %v400, 0.7978846
  %v433 = vmul.f32 %v401, 0.7978846
  %v434 = vmul.f32 %v402, 0.7978846
  %v435 = vtanh.pop %v403
  %v436 = vtanh.pop %v404
  %v437 = vtanh.pop %v405
  %v438 = vtanh.pop %v406
  %v439 = vtanh.pop %v407
  %v440 = vtanh.pop %v408
  %v441 = vtanh.pop %v409
  %v442 = vtanh.pop %v410
  %v443 = vtanh.pop %v411
  %v444 = vtanh.pop %v412
  %v445 = vtanh.pop %v413
  %v446 = vtanh.pop %v414
  %v447 = vtanh.pop %v415
  %v448 = vtanh.pop %v416
  %v449 = vtanh.pop %v417
  %v450 = vtanh.pop %v418
  %v451 = vtanh.pop %v419
  %v452 = vtanh.pop %v420
  %v453 = vtanh.pop %v421
  %v454 = vtanh.pop %v422
  %v455 = vtanh.pop %v423
  %v456 = vtanh.pop %v424
  %v457 = vtanh.pop %v425
  %v458 = vtanh.pop %v426
  %v459 = vtanh.pop %v427
  %v460 = vtanh.pop %v428
  %v461 = vtanh.pop %v429
  %v462 = vtanh.pop %v430
  %v463 = vtanh.pop %v431
  %v464 = vtanh.pop %v432
  %v465 = vtanh.pop %v433
  %v466 = vtanh.pop %v434
  %v467 = vadd.f32 %v435, 1.0
  %v468 = vadd.f32 %v436, 1.0
  %v469 = vadd.f32 %v437, 1.0
  %v470 = vadd.f32 %v438, 1.0
  %v471 = vadd.f32 %v439, 1.0
  %v472 = vadd.f32 %v440, 1.0
  %v473 = vadd.f32 %v441, 1.0
  %v474 = vadd.f32 %v442, 1.0
  %v475 = vadd.f32 %v443, 1.0
  %v476 = vadd.f32 %v444, 1.0
  %v477 = vadd.f32 %v445, 1.0
  %v478 = vadd.f32 %v446, 1.0
  %v479 = vadd.f32 %v447, 1.0
  %v480 = vadd.f32 %v448, 1.0
  %v481 = vadd.f32 %v449, 1.0
  %v482 = vadd.f32 %v450, 1.0
  %v483 = vadd.f32 %v451, 1.0
  %v484 = vadd.f32 %v452, 1.0
  %v485 = vadd.f32 %v453, 1.0
  %v486 = vadd.f32 %v454, 1.0
  %v487 = vadd.f32 %v455, 1.0
  %v488 = vadd.f32 %v456, 1.0
  %v489 = vadd.f32 %v457, 1.0
  %v490 = vadd.f32 %v458, 1.0
  %v491 = vadd.f32 %v459, 1.0
  %v492 = vadd.f32 %v460, 1.0
  %v493 = vadd.f32 %v461, 1.0
  %v494 = vadd.f32 %v462, 1.0
  %v495 = vadd.f32 %v463, 1.0
  %v496 = vadd.f32 %v464, 1.0
  %v497 = vadd.f32 %v465, 1.0
  %v498 = vadd.f32 %v466, 1.0
  %v499 = vmul.f32 %v467, 0.5
  %v500 = vmul.f32 %v468, 0.5
  %v501 = vmul.f32 %v469, 0.5
  %v502 = vmul.f32 %v470, 0.5
  %v503 = vmul.f32 %v471, 0.5
  %v504 = vmul.f32 %v472, 0.5
  %v505 = vmul.f32 %v473, 0.5
  %v506 = vmul.f32 %v474, 0.5
  %v507 = vmul.f32 %v475, 0.5
  %v508 = vmul.f32 %v476, 0.5
  %v509 = vmul.f32 %v477, 0.5
  %v510 = vmul.f32 %v478, 0.5
  %v511 = vmul.f32 %v479, 0.5
  %v512 = vmul.f32 %v480, 0.5
  %v513 = vmul.f32 %v481, 0.5
  %v514 = vmul.f32 %v482, 0.5
  %v515 = vmul.f32 %v483, 0.5
  %v516 = vmul.f32 %v484, 0.5
  %v517 = vmul.f32 %v485, 0.5
  %v518 = vmul.f32 %v486, 0.5
  %v519 = vmul.f32 %v487, 0.5
  %v520 = vmul.f32 %v488, 0.5
  %v521 = vmul.f32 %v489, 0.5
  %v522 = vmul.f32 %v490, 0.5
  %v523 = vmul.f32 %v491, 0.5
  %v524 = vmul.f32 %v492, 0.5
  %v525 = vmul.f32 %v493, 0.5
  %v526 = vmul.f32 %v494, 0.5
  %v527 = vmul.f32 %v495, 0.5
  %v528 = vmul.f32 %v496, 0.5
  %v529 = vmul.f32 %v497, 0.5
  %v530 = vmul.f32 %v498, 0.5
  %v531 = vmul.f32 %v197, %v499
  %v532 = vmul.f32 %v199, %v500
  %v533 = vmul.f32 %v201, %v501
  %v534 = vmul.f32 %v203, %v502
  %v535 = vmul.f32 %v207, %v503
  %v536 = vmul.f32 %v209, %v504
  %v537 = vmul.f32 %v211, %v505
  %v538 = vmul.f32 %v213, %v506
  %v539 = vmul.f32 %v217, %v507
  %v540 = vmul.f32 %v219, %v508
  %v541 = vmul.f32 %v221, %v509
  %v542 = vmul.f32 %v223, %v510
  %v543 = vmul.f32 %v227, %v511
  %v544 = vmul.f32 %v229, %v512
  %v545 = vmul.f32 %v231, %v513
  %v546 = vmul.f32 %v233, %v514
  %v547 = vmul.f32 %v237, %v515
  %v548 = vmul.f32 %v239, %v516
  %v549 = vmul.f32 %v241, %v517
  %v550 = vmul.f32 %v243, %v518
  %v551 = vmul.f32 %v247, %v519
  %v552 = vmul.f32 %v249, %v520
  %v553 = vmul.f32 %v251, %v521
  %v554 = vmul.f32 %v253, %v522
  %v555 = vmul.f32 %v257, %v523
  %v556 = vmul.f32 %v259, %v524
  %v557 = vmul.f32 %v261, %v525
  %v558 = vmul.f32 %v263, %v526
  %v559 = vmul.f32 %v267, %v527
  %v560 = vmul.f32 %v269, %v528
  %v561 = vmul.f32 %v271, %v529
  %v562 = vmul.f32 %v273, %v530
  %v563 = vpack.c.bf16 %v533, %v531
  %v564 = vpack.c.bf16 %v534, %v532
  %v565 = vpack.c.bf16 %v537, %v535
  %v566 = vpack.c.bf16 %v538, %v536
  %v567 = vpack.c.bf16 %v541, %v539
  %v568 = vpack.c.bf16 %v542, %v540
  %v569 = vpack.c.bf16 %v545, %v543
  %v570 = vpack.c.bf16 %v546, %v544
  %v571 = vpack.c.bf16 %v549, %v547
  %v572 = vpack.c.bf16 %v550, %v548
  %v573 = vpack.c.bf16 %v553, %v551
  %v574 = vpack.c.bf16 %v554, %v552
  %v575 = vpack.c.bf16 %v557, %v555
  %v576 = vpack.c.bf16 %v558, %v556
  %v577 = vpack.c.bf16 %v561, %v559
  %v578 = vpack.c.bf16 %v562, %v560
  %v579 = vld [vmem:[%s3] sm:$0xf]
  %v580 = vld [vmem:[%s3 + $0x4] sm:$0xf]
  %v581 = vld [vmem:[%s3 + $0x8] sm:$0xf]
  %v582 = vld [vmem:[%s3 + $0xc] sm:$0xf]
  %v583 = vld [vmem:[%s3 + $0x10] sm:$0xf]
  %v584 = vld [vmem:[%s3 + $0x14] sm:$0xf]
  %v585 = vld [vmem:[%s3 + $0x18] sm:$0xf]
  %v586 = vld [vmem:[%s3 + $0x1c] sm:$0xf]
  %v587 = vld [vmem:[%s3 + $0x20] sm:$0xf]
  %v588 = vld [vmem:[%s3 + $0x24] sm:$0xf]
  %v589 = vld [vmem:[%s3 + $0x28] sm:$0xf]
  %v590 = vld [vmem:[%s3 + $0x2c] sm:$0xf]
  %v591 = vld [vmem:[%s3 + $0x30] sm:$0xf]
  %v592 = vld [vmem:[%s3 + $0x34] sm:$0xf]
  %v593 = vld [vmem:[%s3 + $0x38] sm:$0xf]
  %v594 = vld [vmem:[%s3 + $0x3c] sm:$0xf]
  %v595 = vld [vmem:[%s3 + $0x40] sm:$0xf]
  %v596 = vld [vmem:[%s3 + $0x44] sm:$0xf]
  %v597 = vld [vmem:[%s3 + $0x48] sm:$0xf]
  %v598 = vld [vmem:[%s3 + $0x4c] sm:$0xf]
  %v599 = vld [vmem:[%s3 + $0x50] sm:$0xf]
  %v600 = vld [vmem:[%s3 + $0x54] sm:$0xf]
  %v601 = vld [vmem:[%s3 + $0x58] sm:$0xf]
  %v602 = vld [vmem:[%s3 + $0x5c] sm:$0xf]
  %v603 = vld [vmem:[%s3 + $0x60] sm:$0xf]
  %v604 = vld [vmem:[%s3 + $0x64] sm:$0xf]
  %v605 = vld [vmem:[%s3 + $0x68] sm:$0xf]
  %v606 = vld [vmem:[%s3 + $0x6c] sm:$0xf]
  %v607 = vld [vmem:[%s3 + $0x70] sm:$0xf]
  %v608 = vld [vmem:[%s3 + $0x74] sm:$0xf]
  %v609 = vld [vmem:[%s3 + $0x78] sm:$0xf]
  %v610 = vld [vmem:[%s3 + $0x7c] sm:$0xf]
  %v611 = vld [vmem:[%s4] sm:$0x1]
  %v613 = vlaneseq
  %v614 = vshrl.u32 %v613, 7
  %v615 = vsub.s32 0, %v614
  %v616 = vrot.slane %v611, %v615
  %v650 = vunpack.c.l.b16 %v579
  %v651 = vunpack.c.l.b16 %v580
  %v652 = vunpack.c.l.b16 %v581
  %v653 = vunpack.c.l.b16 %v582
  %v654 = vunpack.c.l.b16 %v583
  %v655 = vunpack.c.l.b16 %v584
  %v656 = vunpack.c.l.b16 %v585
  %v657 = vunpack.c.l.b16 %v586
  %v658 = vunpack.c.l.b16 %v587
  %v659 = vunpack.c.l.b16 %v588
  %v660 = vunpack.c.l.b16 %v589
  %v661 = vunpack.c.l.b16 %v590
  %v662 = vunpack.c.l.b16 %v591
  %v663 = vunpack.c.l.b16 %v592
  %v664 = vunpack.c.l.b16 %v593
  %v665 = vunpack.c.l.b16 %v594
  %v666 = vunpack.c.l.b16 %v595
  %v667 = vunpack.c.l.b16 %v596
  %v668 = vunpack.c.l.b16 %v597
  %v669 = vunpack.c.l.b16 %v598
  %v670 = vunpack.c.l.b16 %v599
  %v671 = vunpack.c.l.b16 %v600
  %v672 = vunpack.c.l.b16 %v601
  %v673 = vunpack.c.l.b16 %v602
  %v674 = vunpack.c.l.b16 %v603
  %v675 = vunpack.c.l.b16 %v604
  %v676 = vunpack.c.l.b16 %v605
  %v677 = vunpack.c.l.b16 %v606
  %v678 = vunpack.c.l.b16 %v607
  %v679 = vunpack.c.l.b16 %v608
  %v680 = vunpack.c.l.b16 %v609
  %v681 = vunpack.c.l.b16 %v610
  %v682 = vpack.c.b16 %v651, %v650
  %v683 = vpack.c.b16 %v653, %v652
  %v684 = vpack.c.b16 %v655, %v654
  %v685 = vpack.c.b16 %v657, %v656
  %v686 = vpack.c.b16 %v659, %v658
  %v687 = vpack.c.b16 %v661, %v660
  %v688 = vpack.c.b16 %v663, %v662
  %v689 = vpack.c.b16 %v665, %v664
  %v690 = vpack.c.b16 %v667, %v666
  %v691 = vpack.c.b16 %v669, %v668
  %v692 = vpack.c.b16 %v671, %v670
  %v693 = vpack.c.b16 %v673, %v672
  %v694 = vpack.c.b16 %v675, %v674
  %v695 = vpack.c.b16 %v677, %v676
  %v696 = vpack.c.b16 %v679, %v678
  %v697 = vpack.c.b16 %v681, %v680
  %714 = vmatprep.subr.bf16.mxu0 0
  %715 = vmatpush1.bf16.msra.mxu0 %v682
  %716 = vmatprep.subr.bf16.mxu0 0
  %717 = vmatpush1.bf16.msra.mxu0 %v683
  %718 = vmatprep.subr.bf16.mxu0 0
  %719 = vmatpush1.bf16.msra.mxu0 %v684
  %720 = vmatprep.subr.bf16.mxu0 0
  %721 = vmatpush1.bf16.msra.mxu0 %v685
  %722 = vmatprep.subr.bf16.mxu0 0
  %723 = vmatpush1.bf16.msra.mxu0 %v686
  %724 = vmatprep.subr.bf16.mxu0 0
  %725 = vmatpush1.bf16.msra.mxu0 %v687
  %726 = vmatprep.subr.bf16.mxu0 0
  %727 = vmatpush1.bf16.msra.mxu0 %v688
  %728 = vmatprep.subr.bf16.mxu0 0
  %729 = vmatpush1.bf16.msra.mxu0 %v689
  %730 = vmatprep.subr.bf16.mxu0 0
  %731 = vmatpush1.bf16.msra.mxu0 %v690
  %732 = vmatprep.subr.bf16.mxu0 0
  %733 = vmatpush1.bf16.msra.mxu0 %v691
  %734 = vmatprep.subr.bf16.mxu0 0
  %735 = vmatpush1.bf16.msra.mxu0 %v692
  %736 = vmatprep.subr.bf16.mxu0 0
  %737 = vmatpush1.bf16.msra.mxu0 %v693
  %738 = vmatprep.subr.bf16.mxu0 0
  %739 = vmatpush1.bf16.msra.mxu0 %v694
  %740 = vmatprep.subr.bf16.mxu0 0
  %741 = vmatpush1.bf16.msra.mxu0 %v695
  %742 = vmatprep.subr.bf16.mxu0 0
  %743 = vmatpush1.bf16.msra.mxu0 %v696
  %744 = vmatprep.subr.bf16.mxu0 0
  %745 = vmatpush1.bf16.msra.mxu0 %v697
  %746 = vmatprep.mubr.bf16.mxu0 %v564
  %747 = vmatmul.mubr.bf16.gmra.mrb[0].mxu0 %v563
  %v748 = vpop.f32.mrb[0].mxu0
  %v749 = vadd.f32 %v616, %v748
  %v750 = vpop.f32.mrb[0].mxu0
  %v751 = vpop.f32.mrb[0].mxu0
  %v752 = vadd.f32 %v616, %v751
  %v753 = vpop.f32.mrb[0].mxu0
  %754 = vmatprep.mubr.bf16.mxu0 %v566
  %755 = vmatmul.mubr.bf16.gmra.mrb[0].mxu0 %v565
  %v756 = vpop.f32.mrb[0].mxu0
  %v757 = vadd.f32 %v616, %v756
  %v758 = vpop.f32.mrb[0].mxu0
  %v759 = vpop.f32.mrb[0].mxu0
  %v760 = vadd.f32 %v616, %v759
  %v761 = vpop.f32.mrb[0].mxu0
  %762 = vmatprep.mubr.bf16.mxu0 %v568
  %763 = vmatmul.mubr.bf16.gmra.mrb[0].mxu0 %v567
  %v764 = vpop.f32.mrb[0].mxu0
  %v765 = vadd.f32 %v616, %v764
  %v766 = vpop.f32.mrb[0].mxu0
  %v767 = vpop.f32.mrb[0].mxu0
  %v768 = vadd.f32 %v616, %v767
  %v769 = vpop.f32.mrb[0].mxu0
  %770 = vmatprep.mubr.bf16.mxu0 %v570
  %771 = vmatmul.mubr.bf16.gmra.mrb[0].mxu0 %v569
  %v772 = vpop.f32.mrb[0].mxu0
  %v773 = vadd.f32 %v616, %v772
  %v774 = vpop.f32.mrb[0].mxu0
  %v775 = vpop.f32.mrb[0].mxu0
  %v776 = vadd.f32 %v616, %v775
  %v777 = vpop.f32.mrb[0].mxu0
  %778 = vmatprep.mubr.bf16.mxu0 %v572
  %779 = vmatmul.mubr.bf16.gmra.mrb[0].mxu0 %v571
  %v780 = vpop.f32.mrb[0].mxu0
  %v781 = vadd.f32 %v616, %v780
  %v782 = vpop.f32.mrb[0].mxu0
  %v783 = vpop.f32.mrb[0].mxu0
  %v784 = vadd.f32 %v616, %v783
  %v785 = vpop.f32.mrb[0].mxu0
  %786 = vmatprep.mubr.bf16.mxu0 %v574
  %787 = vmatmul.mubr.bf16.gmra.mrb[0].mxu0 %v573
  %v788 = vpop.f32.mrb[0].mxu0
  %v789 = vadd.f32 %v616, %v788
  %v790 = vpop.f32.mrb[0].mxu0
  %v791 = vpop.f32.mrb[0].mxu0
  %v792 = vadd.f32 %v616, %v791
  %v793 = vpop.f32.mrb[0].mxu0
  %794 = vmatprep.mubr.bf16.mxu0 %v576
  %795 = vmatmul.mubr.bf16.gmra.mrb[0].mxu0 %v575
  %v796 = vpop.f32.mrb[0].mxu0
  %v797 = vadd.f32 %v616, %v796
  %v798 = vpop.f32.mrb[0].mxu0
  %v799 = vpop.f32.mrb[0].mxu0
  %v800 = vadd.f32 %v616, %v799
  %v801 = vpop.f32.mrb[0].mxu0
  %802 = vmatprep.mubr.bf16.mxu0 %v578
  %803 = vmatmul.mubr.bf16.gmra.mrb[0].mxu0 %v577
  %v804 = vpop.f32.mrb[0].mxu0
  %v805 = vadd.f32 %v616, %v804
  %v806 = vpop.f32.mrb[0].mxu0
  %v807 = vpop.f32.mrb[0].mxu0
  %v808 = vadd.f32 %v616, %v807
  %v809 = vpop.f32.mrb[0].mxu0
  %810 = vdwg.mxu0
  %vm811 = vcmask 261120
  %812 = vst.msk [vmem:[%s5] sm:$0xff] %vm811, %v749
  %813 = vst.msk [vmem:[%s5 + $0x8] sm:$0xff] %vm811, %v752
  %814 = vst.msk [vmem:[%s5 + $0x10] sm:$0xff] %vm811, %v757
  %815 = vst.msk [vmem:[%s5 + $0x18] sm:$0xff] %vm811, %v760
  %816 = vst.msk [vmem:[%s5 + $0x20] sm:$0xff] %vm811, %v765
  %817 = vst.msk [vmem:[%s5 + $0x28] sm:$0xff] %vm811, %v768
  %818 = vst.msk [vmem:[%s5 + $0x30] sm:$0xff] %vm811, %v773
  %819 = vst.msk [vmem:[%s5 + $0x38] sm:$0xff] %vm811, %v776
  %820 = vst.msk [vmem:[%s5 + $0x40] sm:$0xff] %vm811, %v781
  %821 = vst.msk [vmem:[%s5 + $0x48] sm:$0xff] %vm811, %v784
  %822 = vst.msk [vmem:[%s5 + $0x50] sm:$0xff] %vm811, %v789
  %823 = vst.msk [vmem:[%s5 + $0x58] sm:$0xff] %vm811, %v792
  %824 = vst.msk [vmem:[%s5 + $0x60] sm:$0xff] %vm811, %v797
  %825 = vst.msk [vmem:[%s5 + $0x68] sm:$0xff] %vm811, %v800
  %826 = vst.msk [vmem:[%s5 + $0x70] sm:$0xff] %vm811, %v805
  %827 = vst.msk [vmem:[%s5 + $0x78] sm:$0xff] %vm811, %v808
  // Predicated region
  $region22: #{tpu_custom_call.1} parent=0 // pred_check
    _
  $region23: #{tpu_custom_call.1} parent=0 // pred_check_branch
    %829 = sbr.rel (0) target = $region25
  $region24: #{tpu_custom_call.1} parent=0 // pred_region
    _
  $region25: #{tpu_custom_call.1} parent=0 // pred_fallthru
    _
  // Predicated region
  $region26: #{tpu_custom_call.1} parent=0 // pred_check
    _
  $region27: #{tpu_custom_call.1} parent=0 // pred_check_branch
    %831 = sbr.rel (0) target = $region29
  $region28: #{tpu_custom_call.1} parent=0 // pred_region
    _
  $region29: #{tpu_custom_call.1} parent=0 // pred_fallthru
    _

</llo_original>
